<compile_context>
chip_gen: v6e
topology: v6e:2x2x1
jax: 0.10.0
libtpu: 0.0.40
codegen_flags: <defaults>
</compile_context>

<pallas_src>
import functools

import jax
import jax.numpy as jnp
from jax.experimental import pallas as pl
from jax.experimental.pallas import tpu as pltpu


def _pool_l2norm_kernel(x_ref, o_ref, *, kh, kw, inv_k):
    """One image per grid step.

    x_ref: (C, H, W)  -- original NCHW layout, batch dim squeezed by BlockSpec
    o_ref: (16, C)    -- the 16 pooled positions of this image, L2-normalized
                         over channels, row index = i_h * 4 + j_w.
    """
    x = x_ref[...].astype(jnp.float32)                       # (C, H, W)

    # AdaptiveAvgPool2d(4) with uniform windows (H % 4 == 0, W % 4 == 0).
    # Stage A: sum each of the 4 contiguous kw-wide column windows
    # (reduction over the lane dim of a contiguous slice).
    cols = [
        jnp.sum(x[:, :, j * kw:(j + 1) * kw], axis=2, keepdims=True)
        for j in range(4)
    ]
    colsum = jnp.concatenate(cols, axis=2)                   # (C, H, 4)

    # Stage B: sum each of the 4 contiguous kh-tall row windows
    # (reduction over the sublane dim of the already column-reduced data).
    rows = [
        jnp.sum(colsum[:, i * kh:(i + 1) * kh, :], axis=1)   # (C, 4), lane = j
        for i in range(4)
    ]
    pooled = jnp.concatenate(rows, axis=1) * inv_k           # (C, 16), lane = i*4+j

    # Normalize(power=2): x / (||x||_2 + 1e-7) along the channel dim (axis 0).
    sq = jnp.sum(pooled * pooled, axis=0, keepdims=True)     # (1, 16)
    inv_norm = pl.reciprocal(jnp.sqrt(sq) + 1e-7)            # exact reciprocal
    out = pooled * inv_norm                                  # (C, 16)

    # One small 2-D transpose so the stored rows match the PyTorch
    # permute(0,2,3,1).flatten(0,2) order; (16, C) stores are lane-dense
    # for realistic C (>= 128).
    o_ref[...] = out.T.astype(o_ref.dtype)


def reshape_f(x):
    """Pallas implementation of ReshapeF.forward.

    x: (N, C, H, W), H % 4 == 0 and W % 4 == 0.
    returns: (N * 16, C), same dtype as x.
    """
    N, C, H, W = x.shape
    # TODO(synk): general AdaptiveAvgPool2d with uneven (floor/ceil) windows
    # when H or W is not divisible by 4; here windows are uniform.
    assert H % 4 == 0 and W % 4 == 0, "H and W must be divisible by 4"
    kh, kw = H // 4, W // 4
    inv_k = 1.0 / float(kh * kw)

    kernel = functools.partial(_pool_l2norm_kernel, kh=kh, kw=kw, inv_k=inv_k)

    # VMEM budget: double-buffered input block + f32 working copies + output.
    # Only raise the scoped limit when the per-image block actually needs it,
    # and cap below v7x's 64 MiB physical VMEM.
    itemsize = jnp.dtype(x.dtype).itemsize
    in_block = C * H * W * itemsize
    out_block = 16 * C * itemsize
    need = 2 * (in_block + out_block) + 2 * C * H * W * 4 + (2 << 20)
    compiler_kwargs = dict(
        # N axis is independent work -> shards across TensorCores on v7x.
        dimension_semantics=("parallel",),
    )
    if need > 16 * 1024 * 1024:
        compiler_kwargs["vmem_limit_bytes"] = int(min(need, 48 * 1024 * 1024))
    # TODO(synk): for feature maps whose per-image block (C*H*W) exceeds the
    # VMEM budget, additionally tile the channel axis with an accumulated
    # sum-of-squares pass before normalizing.

    out = pl.pallas_call(
        kernel,
        out_shape=jax.ShapeDtypeStruct((N * 16, C), x.dtype),
        grid=(N,),
        in_specs=[
            # Read the original NCHW tensor directly: one image per grid step,
            # full (H, W) minor dims (satisfies the (8, 128) block rule), no
            # XLA-side regroup/transpose pass over HBM.
            pl.BlockSpec((None, C, H, W), lambda n: (n, 0, 0, 0)),
        ],
        out_specs=pl.BlockSpec((16, C), lambda n: (n, 0)),
        compiler_params=pltpu.CompilerParams(**compiler_kwargs),
    )(x)
    return out


def _reference(x):
    # Pure-JAX reference mirroring the PyTorch module exactly.
    N, C, H, W = x.shape
    kh, kw = H // 4, W // 4
    pooled = x.reshape(N, C, 4, kh, 4, kw).mean(axis=(3, 5))       # (N, C, 4, 4)
    xr = jnp.transpose(pooled, (0, 2, 3, 1)).reshape(N * 16, C)    # (N*16, C)
    norm = jnp.sqrt(jnp.sum(xr * xr, axis=1, keepdims=True))
    return xr / (norm + 1e-7)


if __name__ == "__main__":
    key = jax.random.PRNGKey(0)
    x = jax.random.normal(key, (2, 4, 16, 16), dtype=jnp.float32)  # NCHW

    out = reshape_f(x)
    out = jax.block_until_ready(out)

    ref = _reference(x)
    assert out.shape == (2 * 4 * 4, 4), out.shape
    assert jnp.allclose(out, ref, atol=1e-5, rtol=1e-5), "mismatch vs reference"

    print("KERNEL_OK")
</pallas_src>

<mosaic_0001>
module attributes {stable_mosaic.version = 11 : i64} {
  func.func @_pool_l2norm_kernel(%arg0: i32, %arg1: memref<1x4x16x16xf32, #tpu.memory_space<vmem>>, %arg2: memref<16x4xf32, #tpu.memory_space<vmem>>) attributes {dimension_semantics = [#tpu.dimension_semantics<parallel>], iteration_bounds = array<i64: 2>, scalar_prefetch = 0 : i64, scratch_operands = 0 : i64, tpu.core_type = #tpu.core_type<tc>, window_params = [{transform_indices = @transform_0, window_bounds = array<i64: 1, 4, 16, 16>}, {transform_indices = @transform_1, window_bounds = array<i64: 16, 4>}]} {
    %c0 = arith.constant 0 : index
    %c0_0 = arith.constant 0 : index
    %c0_1 = arith.constant 0 : index
    %c0_2 = arith.constant 0 : index
    %0 = vector.load %arg1[%c0, %c0_0, %c0_1, %c0_2] : memref<1x4x16x16xf32, #tpu.memory_space<vmem>>, vector<1x4x16x16xf32>
    %1 = vector.shape_cast %0 : vector<1x4x16x16xf32> to vector<4x16x16xf32>
    %2 = vector.extract_strided_slice %1 {offsets = [0, 0, 0], sizes = [4, 16, 4], strides = [1, 1, 1]} : vector<4x16x16xf32> to vector<4x16x4xf32>
    %cst = arith.constant dense<0.000000e+00> : vector<4x16xf32>
    %3 = vector.multi_reduction <add>, %2, %cst [2] : vector<4x16x4xf32> to vector<4x16xf32>
    %4 = vector.shape_cast %3 : vector<4x16xf32> to vector<4x16x1xf32>
    %5 = vector.extract_strided_slice %1 {offsets = [0, 0, 4], sizes = [4, 16, 4], strides = [1, 1, 1]} : vector<4x16x16xf32> to vector<4x16x4xf32>
    %cst_3 = arith.constant dense<0.000000e+00> : vector<4x16xf32>
    %6 = vector.multi_reduction <add>, %5, %cst_3 [2] : vector<4x16x4xf32> to vector<4x16xf32>
    %7 = vector.shape_cast %6 : vector<4x16xf32> to vector<4x16x1xf32>
    %8 = vector.extract_strided_slice %1 {offsets = [0, 0, 8], sizes = [4, 16, 4], strides = [1, 1, 1]} : vector<4x16x16xf32> to vector<4x16x4xf32>
    %cst_4 = arith.constant dense<0.000000e+00> : vector<4x16xf32>
    %9 = vector.multi_reduction <add>, %8, %cst_4 [2] : vector<4x16x4xf32> to vector<4x16xf32>
    %10 = vector.shape_cast %9 : vector<4x16xf32> to vector<4x16x1xf32>
    %11 = vector.extract_strided_slice %1 {offsets = [0, 0, 12], sizes = [4, 16, 4], strides = [1, 1, 1]} : vector<4x16x16xf32> to vector<4x16x4xf32>
    %cst_5 = arith.constant dense<0.000000e+00> : vector<4x16xf32>
    %12 = vector.multi_reduction <add>, %11, %cst_5 [2] : vector<4x16x4xf32> to vector<4x16xf32>
    %13 = vector.shape_cast %12 : vector<4x16xf32> to vector<4x16x1xf32>
    %14 = tpu.concatenate %4, %7, %10, %13 in 2 : vector<4x16x1xf32>, vector<4x16x1xf32>, vector<4x16x1xf32>, vector<4x16x1xf32> -> vector<4x16x4xf32>
    %15 = vector.extract_strided_slice %14 {offsets = [0, 0, 0], sizes = [4, 4, 4], strides = [1, 1, 1]} : vector<4x16x4xf32> to vector<4x4x4xf32>
    %cst_6 = arith.constant dense<0.000000e+00> : vector<4x4xf32>
    %16 = vector.multi_reduction <add>, %15, %cst_6 [1] : vector<4x4x4xf32> to vector<4x4xf32>
    %17 = vector.extract_strided_slice %14 {offsets = [0, 4, 0], sizes = [4, 4, 4], strides = [1, 1, 1]} : vector<4x16x4xf32> to vector<4x4x4xf32>
    %cst_7 = arith.constant dense<0.000000e+00> : vector<4x4xf32>
    %18 = vector.multi_reduction <add>, %17, %cst_7 [1] : vector<4x4x4xf32> to vector<4x4xf32>
    %19 = vector.extract_strided_slice %14 {offsets = [0, 8, 0], sizes = [4, 4, 4], strides = [1, 1, 1]} : vector<4x16x4xf32> to vector<4x4x4xf32>
    %cst_8 = arith.constant dense<0.000000e+00> : vector<4x4xf32>
    %20 = vector.multi_reduction <add>, %19, %cst_8 [1] : vector<4x4x4xf32> to vector<4x4xf32>
    %21 = vector.extract_strided_slice %14 {offsets = [0, 12, 0], sizes = [4, 4, 4], strides = [1, 1, 1]} : vector<4x16x4xf32> to vector<4x4x4xf32>
    %cst_9 = arith.constant dense<0.000000e+00> : vector<4x4xf32>
    %22 = vector.multi_reduction <add>, %21, %cst_9 [1] : vector<4x4x4xf32> to vector<4x4xf32>
    %23 = tpu.concatenate %16, %18, %20, %22 in 1 : vector<4x4xf32>, vector<4x4xf32>, vector<4x4xf32>, vector<4x4xf32> -> vector<4x16xf32>
    %cst_10 = arith.constant 6.250000e-02 : f32
    %24 = vector.broadcast %cst_10 : f32 to vector<4x16xf32>
    %25 = arith.mulf %23, %24 : vector<4x16xf32>
    %26 = arith.mulf %25, %25 : vector<4x16xf32>
    %cst_11 = arith.constant dense<0.000000e+00> : vector<16xf32>
    %27 = vector.multi_reduction <add>, %26, %cst_11 [0] : vector<4x16xf32> to vector<16xf32>
    %28 = vector.shape_cast %27 : vector<16xf32> to vector<1x16xf32>
    %29 = math.sqrt %28 : vector<1x16xf32>
    %cst_12 = arith.constant 1.000000e-07 : f32
    %30 = vector.broadcast %cst_12 : f32 to vector<1x16xf32>
    %31 = arith.addf %29, %30 : vector<1x16xf32>
    %32 = tpu.reciprocal %31 : vector<1x16xf32> -> vector<1x16xf32>
    %33 = vector.broadcast %32 : vector<1x16xf32> to vector<4x16xf32>
    %34 = arith.mulf %25, %33 : vector<4x16xf32>
    %35 = tpu.transpose %34, [1, 0] : vector<4x16xf32> -> vector<16x4xf32>
    %c0_13 = arith.constant 0 : index
    %c0_14 = arith.constant 0 : index
    %36 = vector.load %arg2[%c0_13, %c0_14] : memref<16x4xf32, #tpu.memory_space<vmem>>, vector<16x4xf32>
    tpu.vector_store %arg2[%c0_13, %c0_14], %35 {strides = array<i32>} : memref<16x4xf32, #tpu.memory_space<vmem>>, vector<16x4xf32>,
    return
  }
  func.func @transform_0(%arg0: i32) -> (i32, i32, i32, i32) {
    %c0_i32 = arith.constant 0 : i32
    %c0_i32_0 = arith.constant 0 : i32
    %c0_i32_1 = arith.constant 0 : i32
    %c0_i32_2 = arith.constant 0 : i32
    return %arg0, %c0_i32, %c0_i32_0, %c0_i32_1 : i32, i32, i32, i32
  }
  func.func @transform_1(%arg0: i32) -> (i32, i32) {
    %c0_i32 = arith.constant 0 : i32
    %c0_i32_0 = arith.constant 0 : i32
    return %arg0, %c0_i32 : i32, i32
  }
}

</mosaic_0001>

<llo_original>
// kernel: tpu_custom_call.1
$region0: #{tpu_custom_call.1}
  #allocation0 [shape = 'u32[]', space=smem, size = 0x4, offset = 0x4, fixed_abs, tag = 'smem constant byte address 0x4 - core index']
  #allocation1 [shape = 'u32[144,128]{1,0:T(1,128)}', space=vmem, size = 0x12000, scoped, tag = 'internal scratch']
  %s0 = inlined_call_operand.hbm [shape: f32[2,4,16,16], index: 0, kind: input, shape index: {}]
  %s1 = inlined_call_operand.vmem [shape: f32[32,4], index: 1, kind: output, shape index: {}]
  %s2 = sld [smem:[#allocation0]]
  $region41: #{tpu_custom_call.1} parent=0
    _
  %s4 = ssub.s32 1, %s2
  %s5 = scalar_select 0, %s4, %s2
  $region1: #{tpu_custom_call.1} parent=0
    #allocation2 [shape = 'u8[65536]{0}', space=vmem, size = 0x10000, scoped, tag = 'input window, operand 0']
    #allocation3 [shape = 's32[2]{0}', space=sflag, size = 0x8, scoped, tag = 'scoped memory for tpu_custom_call.1']
    %6 = vsyncpa [#allocation3], 0
    %s7 = scalar_lea.sflag [#allocation3], 1
    %8 = vsyncpa %s7, 0
    loop: start=0, step=1, limit=4
    $region2: #{tpu_custom_call.1} parent=1 // loop_pre_header
      _
    $region3: #{tpu_custom_call.1} parent=1 // loop_header
      %s10 = sphi 0, %s14
      %p11 = scmp.ge.s32.totalorder %s10, 4
      %s20 = sphi 0, %s22
      %s23 = sphi 0, %s20
      %s24 = sphi 0, %s23
      %s40 = sphi 0, %s24
      %s46 = sphi 0, %s48
      %s49 = sphi 0, %s46
      %s50 = sphi 0, %s49
      %s66 = sphi 0, %s50
    $region4: #{tpu_custom_call.1} parent=1 // loop_header_branch
      %13 = sbr.rel (%p11) target = $region8
    $region5: #{tpu_custom_call.1} parent=1 // loop_body
      %s15 = ssub.s32 %s10, 1
      %s16 = ssub.s32 %s10, 2
      %s17 = sadd.s32 %s10, 1
      %s18 = ssub.s32 %s10, %s17
      %p19 = scmp.eq.s32.totalorder %s18, 0
      %s21 = sadd.s32 %s20, 1
      %s22 = scalar_select %p19, %s20, %s21
      %p25 = pneg %p19
      %p26 = scmp.eq.s32.totalorder %s10, 1
      %p27 = por %p25, %p26
      %p28 = scmp.ne.s32.totalorder %s20, %s23
      %p29 = scmp.eq.s32.totalorder %s10, 0
      %p30 = por %p28, %p29
      %p31 = scmp.ne.s32.totalorder %s20, %s23
      %p32 = scmp.eq.s32.totalorder %s15, 1
      %p33 = por %p31, %p32
      %p34 = scmp.ne.s32.totalorder %s23, %s24
      %p35 = scmp.eq.s32.totalorder %s15, 0
      %p36 = por %p34, %p35
      %p37 = scmp.ne.s32.totalorder %s23, %s24
      %p38 = scmp.eq.s32.totalorder %s16, 1
      %p39 = por %p37, %p38
      %p41 = scmp.ne.s32.totalorder %s24, %s40
      %p42 = scmp.eq.s32.totalorder %s16, 0
      %p43 = por %p41, %p42
      %s44 = ssub.s32 %s10, %s17
      %p45 = scmp.eq.s32.totalorder %s44, 0
      %s47 = sadd.s32 %s46, 1
      %s48 = scalar_select %p45, %s46, %s47
      %p51 = pneg %p45
      %p52 = scmp.eq.s32.totalorder %s10, 1
      %p53 = por %p51, %p52
      %p54 = scmp.ne.s32.totalorder %s46, %s49
      %p55 = scmp.eq.s32.totalorder %s10, 0
      %p56 = por %p54, %p55
      %p57 = scmp.ne.s32.totalorder %s46, %s49
      %p58 = scmp.eq.s32.totalorder %s15, 1
      %p59 = por %p57, %p58
      %p60 = scmp.ne.s32.totalorder %s49, %s50
      %p61 = scmp.eq.s32.totalorder %s15, 0
      %p62 = por %p60, %p61
      %p63 = scmp.ne.s32.totalorder %s49, %s50
      %p64 = scmp.eq.s32.totalorder %s16, 1
      %p65 = por %p63, %p64
      %p67 = scmp.ne.s32.totalorder %s50, %s66
      %p68 = scmp.eq.s32.totalorder %s16, 0
      %p69 = por %p67, %p68
      %p70 = scmp.le.s32.totalorder 1, %s10
      %p71 = scmp.lt.s32.totalorder %s10, 3
      %p72 = pnand %p70, %p71
      %p73 = pneg %p72
      // Predicated region
      $region9: #{tpu_custom_call.1} parent=5 // pred_check
        _
      $region10: #{tpu_custom_call.1} parent=5 // pred_check_branch
        %75 = sbr.rel (%p72) target = $region12
      $region11: #{tpu_custom_call.1} parent=5 // pred_region
        %s76 = ssub.s32 %s10, 1
      $region12: #{tpu_custom_call.1} parent=5 // pred_fallthru
        _
      %p77 = scmp.lt.s32.totalorder %s10, 2
      // Predicated region
      $region13: #{tpu_custom_call.1} parent=5 // pred_check
        %p78 = pneg %p77
      $region14: #{tpu_custom_call.1} parent=5 // pred_check_branch
        %80 = sbr.rel (%p78) target = $region16
      $region15: #{tpu_custom_call.1} parent=5 // pred_region
        // Predicated region
        $region17: #{tpu_custom_call.1} parent=15 // pred_check
          %p81 = pneg %p30
        $region18: #{tpu_custom_call.1} parent=15 // pred_check_branch
          %83 = sbr.rel (%p81) target = $region20
        $region19: #{tpu_custom_call.1} parent=15 // pred_region
          %s84 = sand.u32 %s20, 1
          %s85 = scalar_lea.sflag [#allocation3], %s84
          %s86 = sand.u32 %s20, 1
          %s87 = smul.addr %s86, 64
          %s88 = scalar_lea.vmem [#allocation2], %s87
          %s90 = ssub.s32 1024, 1024
          %91 = vsyncadd %s85, %s90
          %s92 = smul.addr %s10, 8
          %s93 = smul.addr %s92, 128
          %s94 = scalar_lea.hbm %s0, %s93
          %s95 = sshll.u32 %s88, 4
          %s96 = int_to_ptr.vmem [resolvable:$true] %s95
          %101 = dma.hbm_to_vmem [thread:$0]  %s94, 1024, %s96, %s85, 128, 128, 8
        $region20: #{tpu_custom_call.1} parent=15 // pred_fallthru
          _
      $region16: #{tpu_custom_call.1} parent=5 // pred_fallthru
        _
      %p102 = scmp.le.s32.totalorder 1, %s10
      %p103 = scmp.lt.s32.totalorder %s10, 3
      %p104 = pnand %p102, %p103
      %p105 = pneg %p104
      // Predicated region
      $region21: #{tpu_custom_call.1} parent=5 // pred_check
        _
      $region22: #{tpu_custom_call.1} parent=5 // pred_check_branch
        %107 = sbr.rel (%p104) target = $region24
      $region23: #{tpu_custom_call.1} parent=5 // pred_region
        %s108 = ssub.s32 %s10, 1
        %s109 = sand.u32 %s23, 1
        %s110 = scalar_lea.sflag [#allocation3], %s109
        %s111 = sand.u32 %s23, 1
        %s112 = smul.addr %s111, 64
        %s113 = scalar_lea.vmem [#allocation2], %s112
        // Predicated region
        $region25: #{tpu_custom_call.1} parent=23 // pred_check
          %p114 = pneg %p36
        $region26: #{tpu_custom_call.1} parent=23 // pred_check_branch
          %116 = sbr.rel (%p114) target = $region28
        $region27: #{tpu_custom_call.1} parent=23 // pred_region
          %117 = dma.done %s110, 1024
        $region28: #{tpu_custom_call.1} parent=23 // pred_fallthru
          _
        %s118 = sand.u32 %s23, 1
        %s119 = scalar_lea.sflag [#allocation3], %s118
        %s120 = sand.u32 %s23, 1
        %s121 = smul.addr %s120, 64
        %s122 = scalar_lea.vmem [#allocation2], %s121
        %p123 = pneg %p36
        %p124 = pneg %p33
        %p125 = pneg %p62
        %p126 = pneg %p59
        %s127 = smul.u32 2, %s15
        %p128 = scmp.lt.s32.totalorder %s127, 3
        %s129 = scalar_select %p128, %s127, 3
        %s130 = smul.addr %s129, 8
        %s131 = scalar_lea.vmem %s1, %s130
        %s132 = smul.u32 2, %s15
        %p133 = scmp.lt.s32.totalorder %s132, 3
        %s134 = scalar_select %p133, %s132, 3
        %s135 = smul.addr %s134, 8
        %s136 = scalar_lea.vmem %s1, %s135
        %s137 = smul.u32 2, %s15
        %v138 = vld [vmem:[%s113] sm:$0xff]
        %v139 = vld [vmem:[%s113 + $0x8] sm:$0xff]
        %v140 = vld [vmem:[%s113 + $0x10] sm:$0xff]
        %v141 = vld [vmem:[%s113 + $0x18] sm:$0xff]
        %v142 = vld [vmem:[%s113 + $0x20] sm:$0xff]
        %v143 = vld [vmem:[%s113 + $0x28] sm:$0xff]
        %v144 = vld [vmem:[%s113 + $0x30] sm:$0xff]
        %v145 = vld [vmem:[%s113 + $0x38] sm:$0xff]
        %vm146 = vcmask 31744
        %v147 = vsel %vm146, %v138, 0.0
        %148 = vadd.xlane.f32.xlu0 %v147
        %v149 = vpop.xlane.xlu0 %148
        %v150 = vsel %vm146, %v139, 0.0
        %151 = vadd.xlane.f32.xlu0 %v150
        %v152 = vpop.xlane.xlu0 %151
        %v153 = vsel %vm146, %v140, 0.0
        %154 = vadd.xlane.f32.xlu0 %v153
        %v155 = vpop.xlane.xlu0 %154
        %v156 = vsel %vm146, %v141, 0.0
        %157 = vadd.xlane.f32.xlu0 %v156
        %v158 = vpop.xlane.xlu0 %157
        %v159 = vsel %vm146, %v142, 0.0
        %160 = vadd.xlane.f32.xlu0 %v159
        %v161 = vpop.xlane.xlu0 %160
        %v162 = vsel %vm146, %v143, 0.0
        %163 = vadd.xlane.f32.xlu0 %v162
        %v164 = vpop.xlane.xlu0 %163
        %v165 = vsel %vm146, %v144, 0.0
        %166 = vadd.xlane.f32.xlu0 %v165
        %v167 = vpop.xlane.xlu0 %166
        %v168 = vsel %vm146, %v145, 0.0
        %169 = vadd.xlane.f32.xlu0 %v168
        %v170 = vpop.xlane.xlu0 %169
        %179 = vrot.lane.b32.xlu0 %v138, 124
        %v180 = vpop.permute.xlu0 %179
        %181 = vrot.lane.b32.xlu0 %v139, 124
        %v182 = vpop.permute.xlu0 %181
        %183 = vrot.lane.b32.xlu0 %v140, 124
        %v184 = vpop.permute.xlu0 %183
        %185 = vrot.lane.b32.xlu0 %v141, 124
        %v186 = vpop.permute.xlu0 %185
        %187 = vrot.lane.b32.xlu0 %v142, 124
        %v188 = vpop.permute.xlu0 %187
        %189 = vrot.lane.b32.xlu0 %v143, 124
        %v190 = vpop.permute.xlu0 %189
        %191 = vrot.lane.b32.xlu0 %v144, 124
        %v192 = vpop.permute.xlu0 %191
        %193 = vrot.lane.b32.xlu0 %v145, 124
        %v194 = vpop.permute.xlu0 %193
        %v203 = vsel %vm146, %v180, 0.0
        %204 = vadd.xlane.f32.xlu0 %v203
        %v205 = vpop.xlane.xlu0 %204
        %v206 = vsel %vm146, %v182, 0.0
        %207 = vadd.xlane.f32.xlu0 %v206
        %v208 = vpop.xlane.xlu0 %207
        %v209 = vsel %vm146, %v184, 0.0
        %210 = vadd.xlane.f32.xlu0 %v209
        %v211 = vpop.xlane.xlu0 %210
        %v212 = vsel %vm146, %v186, 0.0
        %213 = vadd.xlane.f32.xlu0 %v212
        %v214 = vpop.xlane.xlu0 %213
        %v215 = vsel %vm146, %v188, 0.0
        %216 = vadd.xlane.f32.xlu0 %v215
        %v217 = vpop.xlane.xlu0 %216
        %v218 = vsel %vm146, %v190, 0.0
        %219 = vadd.xlane.f32.xlu0 %v218
        %v220 = vpop.xlane.xlu0 %219
        %v221 = vsel %vm146, %v192, 0.0
        %222 = vadd.xlane.f32.xlu0 %v221
        %v223 = vpop.xlane.xlu0 %222
        %v224 = vsel %vm146, %v194, 0.0
        %225 = vadd.xlane.f32.xlu0 %v224
        %v226 = vpop.xlane.xlu0 %225
        %227 = vrot.lane.b32.xlu0 %v138, 120
        %v228 = vpop.permute.xlu0 %227
        %229 = vrot.lane.b32.xlu0 %v139, 120
        %v230 = vpop.permute.xlu0 %229
        %231 = vrot.lane.b32.xlu0 %v140, 120
        %v232 = vpop.permute.xlu0 %231
        %233 = vrot.lane.b32.xlu0 %v141, 120
        %v234 = vpop.permute.xlu0 %233
        %235 = vrot.lane.b32.xlu0 %v142, 120
        %v236 = vpop.permute.xlu0 %235
        %237 = vrot.lane.b32.xlu0 %v143, 120
        %v238 = vpop.permute.xlu0 %237
        %239 = vrot.lane.b32.xlu0 %v144, 120
        %v240 = vpop.permute.xlu0 %239
        %241 = vrot.lane.b32.xlu0 %v145, 120
        %v242 = vpop.permute.xlu0 %241
        %v251 = vsel %vm146, %v228, 0.0
        %252 = vadd.xlane.f32.xlu0 %v251
        %v253 = vpop.xlane.xlu0 %252
        %v254 = vsel %vm146, %v230, 0.0
        %255 = vadd.xlane.f32.xlu0 %v254
        %v256 = vpop.xlane.xlu0 %255
        %v257 = vsel %vm146, %v232, 0.0
        %258 = vadd.xlane.f32.xlu0 %v257
        %v259 = vpop.xlane.xlu0 %258
        %v260 = vsel %vm146, %v234, 0.0
        %261 = vadd.xlane.f32.xlu0 %v260
        %v262 = vpop.xlane.xlu0 %261
        %v263 = vsel %vm146, %v236, 0.0
        %264 = vadd.xlane.f32.xlu0 %v263
        %v265 = vpop.xlane.xlu0 %264
        %v266 = vsel %vm146, %v238, 0.0
        %267 = vadd.xlane.f32.xlu0 %v266
        %v268 = vpop.xlane.xlu0 %267
        %v269 = vsel %vm146, %v240, 0.0
        %270 = vadd.xlane.f32.xlu0 %v269
        %v271 = vpop.xlane.xlu0 %270
        %v272 = vsel %vm146, %v242, 0.0
        %273 = vadd.xlane.f32.xlu0 %v272
        %v274 = vpop.xlane.xlu0 %273
        %275 = vrot.lane.b32.xlu0 %v138, 116
        %v276 = vpop.permute.xlu0 %275
        %277 = vrot.lane.b32.xlu0 %v139, 116
        %v278 = vpop.permute.xlu0 %277
        %279 = vrot.lane.b32.xlu0 %v140, 116
        %v280 = vpop.permute.xlu0 %279
        %281 = vrot.lane.b32.xlu0 %v141, 116
        %v282 = vpop.permute.xlu0 %281
        %283 = vrot.lane.b32.xlu0 %v142, 116
        %v284 = vpop.permute.xlu0 %283
        %285 = vrot.lane.b32.xlu0 %v143, 116
        %v286 = vpop.permute.xlu0 %285
        %287 = vrot.lane.b32.xlu0 %v144, 116
        %v288 = vpop.permute.xlu0 %287
        %289 = vrot.lane.b32.xlu0 %v145, 116
        %v290 = vpop.permute.xlu0 %289
        %v299 = vsel %vm146, %v276, 0.0
        %300 = vadd.xlane.f32.xlu0 %v299
        %v301 = vpop.xlane.xlu0 %300
        %v302 = vsel %vm146, %v278, 0.0
        %303 = vadd.xlane.f32.xlu0 %v302
        %v304 = vpop.xlane.xlu0 %303
        %v305 = vsel %vm146, %v280, 0.0
        %306 = vadd.xlane.f32.xlu0 %v305
        %v307 = vpop.xlane.xlu0 %306
        %v308 = vsel %vm146, %v282, 0.0
        %309 = vadd.xlane.f32.xlu0 %v308
        %v310 = vpop.xlane.xlu0 %309
        %v311 = vsel %vm146, %v284, 0.0
        %312 = vadd.xlane.f32.xlu0 %v311
        %v313 = vpop.xlane.xlu0 %312
        %v314 = vsel %vm146, %v286, 0.0
        %315 = vadd.xlane.f32.xlu0 %v314
        %v316 = vpop.xlane.xlu0 %315
        %v317 = vsel %vm146, %v288, 0.0
        %318 = vadd.xlane.f32.xlu0 %v317
        %v319 = vpop.xlane.xlu0 %318
        %v320 = vsel %vm146, %v290, 0.0
        %321 = vadd.xlane.f32.xlu0 %v320
        %v322 = vpop.xlane.xlu0 %321
        %vm323 = vcmask 7168
        %v324 = vsel %vm323, %v149, %v205
        %v325 = vsel %vm323, %v152, %v208
        %v326 = vsel %vm323, %v155, %v211
        %v327 = vsel %vm323, %v158, %v214
        %v328 = vsel %vm323, %v161, %v217
        %v329 = vsel %vm323, %v164, %v220
        %v330 = vsel %vm323, %v167, %v223
        %v331 = vsel %vm323, %v170, %v226
        %vm332 = vcmask 15360
        %v333 = vsel %vm332, %v324, %v253
        %v334 = vsel %vm332, %v325, %v256
        %v335 = vsel %vm332, %v326, %v259
        %v336 = vsel %vm332, %v327, %v262
        %v337 = vsel %vm332, %v328, %v265
        %v338 = vsel %vm332, %v329, %v268
        %v339 = vsel %vm332, %v330, %v271
        %v340 = vsel %vm332, %v331, %v274
        %vm341 = vcmask 23552
        %v342 = vsel %vm341, %v333, %v301
        %v343 = vsel %vm341, %v334, %v304
        %v344 = vsel %vm341, %v335, %v307
        %v345 = vsel %vm341, %v336, %v310
        %v346 = vsel %vm341, %v337, %v313
        %v347 = vsel %vm341, %v338, %v316
        %v348 = vsel %vm341, %v339, %v319
        %v349 = vsel %vm341, %v340, %v322
        %vm350 = vcmask 27648
        %v351 = vsel %vm350, %v342, 0.0
        %v352 = vrot.slane %v351, 4
        %v353 = vadd.f32 %v351, %v352
        %v354 = vrot.slane %v353, 2
        %v355 = vadd.f32 %v353, %v354
        %v356 = vrot.slane %v355, 1
        %v357 = vadd.f32 %v355, %v356
        %v358 = vsel %vm350, %v344, 0.0
        %v359 = vrot.slane %v358, 4
        %v360 = vadd.f32 %v358, %v359
        %v361 = vrot.slane %v360, 2
        %v362 = vadd.f32 %v360, %v361
        %v363 = vrot.slane %v362, 1
        %v364 = vadd.f32 %v362, %v363
        %v365 = vsel %vm350, %v346, 0.0
        %v366 = vrot.slane %v365, 4
        %v367 = vadd.f32 %v365, %v366
        %v368 = vrot.slane %v367, 2
        %v369 = vadd.f32 %v367, %v368
        %v370 = vrot.slane %v369, 1
        %v371 = vadd.f32 %v369, %v370
        %v372 = vsel %vm350, %v348, 0.0
        %v373 = vrot.slane %v372, 4
        %v374 = vadd.f32 %v372, %v373
        %v375 = vrot.slane %v374, 2
        %v376 = vadd.f32 %v374, %v375
        %v377 = vrot.slane %v376, 1
        %v378 = vadd.f32 %v376, %v377
        %v383 = vrot.slane %v342, 4
        %v384 = vrot.slane %v344, 4
        %v385 = vrot.slane %v346, 4
        %v386 = vrot.slane %v348, 4
        %v391 = vsel %vm350, %v383, 0.0
        %v392 = vrot.slane %v391, 4
        %v393 = vadd.f32 %v391, %v392
        %v394 = vrot.slane %v393, 2
        %v395 = vadd.f32 %v393, %v394
        %v396 = vrot.slane %v395, 1
        %v397 = vadd.f32 %v395, %v396
        %v398 = vsel %vm350, %v384, 0.0
        %v399 = vrot.slane %v398, 4
        %v400 = vadd.f32 %v398, %v399
        %v401 = vrot.slane %v400, 2
        %v402 = vadd.f32 %v400, %v401
        %v403 = vrot.slane %v402, 1
        %v404 = vadd.f32 %v402, %v403
        %v405 = vsel %vm350, %v385, 0.0
        %v406 = vrot.slane %v405, 4
        %v407 = vadd.f32 %v405, %v406
        %v408 = vrot.slane %v407, 2
        %v409 = vadd.f32 %v407, %v408
        %v410 = vrot.slane %v409, 1
        %v411 = vadd.f32 %v409, %v410
        %v412 = vsel %vm350, %v386, 0.0
        %v413 = vrot.slane %v412, 4
        %v414 = vadd.f32 %v412, %v413
        %v415 = vrot.slane %v414, 2
        %v416 = vadd.f32 %v414, %v415
        %v417 = vrot.slane %v416, 1
        %v418 = vadd.f32 %v416, %v417
        %v419 = vsel %vm350, %v343, 0.0
        %v420 = vrot.slane %v419, 4
        %v421 = vadd.f32 %v419, %v420
        %v422 = vrot.slane %v421, 2
        %v423 = vadd.f32 %v421, %v422
        %v424 = vrot.slane %v423, 1
        %v425 = vadd.f32 %v423, %v424
        %v426 = vsel %vm350, %v345, 0.0
        %v427 = vrot.slane %v426, 4
        %v428 = vadd.f32 %v426, %v427
        %v429 = vrot.slane %v428, 2
        %v430 = vadd.f32 %v428, %v429
        %v431 = vrot.slane %v430, 1
        %v432 = vadd.f32 %v430, %v431
        %v433 = vsel %vm350, %v347, 0.0
        %v434 = vrot.slane %v433, 4
        %v435 = vadd.f32 %v433, %v434
        %v436 = vrot.slane %v435, 2
        %v437 = vadd.f32 %v435, %v436
        %v438 = vrot.slane %v437, 1
        %v439 = vadd.f32 %v437, %v438
        %v440 = vsel %vm350, %v349, 0.0
        %v441 = vrot.slane %v440, 4
        %v442 = vadd.f32 %v440, %v441
        %v443 = vrot.slane %v442, 2
        %v444 = vadd.f32 %v442, %v443
        %v445 = vrot.slane %v444, 1
        %v446 = vadd.f32 %v444, %v445
        %v451 = vrot.slane %v343, 4
        %v452 = vrot.slane %v345, 4
        %v453 = vrot.slane %v347, 4
        %v454 = vrot.slane %v349, 4
        %v459 = vsel %vm350, %v451, 0.0
        %v460 = vrot.slane %v459, 4
        %v461 = vadd.f32 %v459, %v460
        %v462 = vrot.slane %v461, 2
        %v463 = vadd.f32 %v461, %v462
        %v464 = vrot.slane %v463, 1
        %v465 = vadd.f32 %v463, %v464
        %v466 = vsel %vm350, %v452, 0.0
        %v467 = vrot.slane %v466, 4
        %v468 = vadd.f32 %v466, %v467
        %v469 = vrot.slane %v468, 2
        %v470 = vadd.f32 %v468, %v469
        %v471 = vrot.slane %v470, 1
        %v472 = vadd.f32 %v470, %v471
        %v473 = vsel %vm350, %v453, 0.0
        %v474 = vrot.slane %v473, 4
        %v475 = vadd.f32 %v473, %v474
        %v476 = vrot.slane %v475, 2
        %v477 = vadd.f32 %v475, %v476
        %v478 = vrot.slane %v477, 1
        %v479 = vadd.f32 %v477, %v478
        %v480 = vsel %vm350, %v454, 0.0
        %v481 = vrot.slane %v480, 4
        %v482 = vadd.f32 %v480, %v481
        %v483 = vrot.slane %v482, 2
        %v484 = vadd.f32 %v482, %v483
        %v485 = vrot.slane %v484, 1
        %v486 = vadd.f32 %v484, %v485
        %vm491 = vcmask 1041409
        %v492 = vsel %vm491, %v364, %v357
        %vm493 = vcmask 1042434
        %v494 = vsel %vm493, %v371, %v492
        %vm495 = vcmask 1043459
        %v496 = vsel %vm495, %v378, %v494
        %v502 = vsel %vm491, %v404, %v397
        %v503 = vsel %vm493, %v411, %v502
        %v504 = vsel %vm495, %v418, %v503
        %505 = vrot.lane.b32.xlu0 %v504, 4
        %v506 = vpop.permute.xlu0 %505
        %v512 = vsel %vm491, %v432, %v425
        %v513 = vsel %vm493, %v439, %v512
        %v514 = vsel %vm495, %v446, %v513
        %515 = vrot.lane.b32.xlu0 %v514, 8
        %v516 = vpop.permute.xlu0 %515
        %v522 = vsel %vm491, %v472, %v465
        %v523 = vsel %vm493, %v479, %v522
        %v524 = vsel %vm495, %v486, %v523
        %525 = vrot.lane.b32.xlu0 %v524, 12
        %v526 = vpop.permute.xlu0 %525
        %v528 = vsel %vm146, %v496, %v506
        %vm529 = vcmask 64512
        %v530 = vsel %vm529, %v528, %v516
        %vm531 = vcmask 97280
        %v532 = vsel %vm531, %v530, %v526
        %v533 = vmul.f32 %v532, 0.0625
        %v534 = vmul.f32 %v533, %v533
        %vm535 = vcmask 125952
        %v536 = vsel %vm535, %v534, 0.0
        %v537 = vrot.slane %v536, 4
        %v538 = vadd.f32 %v536, %v537
        %v539 = vrot.slane %v538, 2
        %v540 = vadd.f32 %v538, %v539
        %v541 = vrot.slane %v540, 1
        %v542 = vadd.f32 %v540, %v541
        %v543 = vrsqrt.pop %v542
        %v544 = vmul.f32 %v542, %v543
        %vm545 = vcmp.eq.f32.partialorder %v542, inf
        %v546 = vsel %vm545, %v542, %v544
        %vm547 = vcmp.eq.f32.partialorder %v542, 0.0
        %v548 = vand.u32 %v542, 2147483648
        %v549 = vsel %vm547, %v548, %v546
        %v550 = vadd.f32 %v549, 1e-07
        %v551 = vrcp.pop %v550
        %v552 = vmul.f32 %v533, %v551
        %553 = vxpose.xlu0.b32.start [1/16] %v552, 128
        %554 = vxpose.xlu0.b32.cont [2/16] 0.0, 128
        %555 = vxpose.xlu0.b32.cont [3/16] 0.0, 128
        %556 = vxpose.xlu0.b32.cont [4/16] 0.0, 128
        %557 = vxpose.xlu0.b32.cont [5/16] 0.0, 128
        %558 = vxpose.xlu0.b32.cont [6/16] 0.0, 128
        %559 = vxpose.xlu0.b32.cont [7/16] 0.0, 128
        %560 = vxpose.xlu0.b32.cont [8/16] 0.0, 128
        %561 = vxpose.xlu0.b32.cont [9/16] 0.0, 128
        %562 = vxpose.xlu0.b32.cont [10/16] 0.0, 128
        %563 = vxpose.xlu0.b32.cont [11/16] 0.0, 128
        %564 = vxpose.xlu0.b32.cont [12/16] 0.0, 128
        %565 = vxpose.xlu0.b32.cont [13/16] 0.0, 128
        %566 = vxpose.xlu0.b32.cont [14/16] 0.0, 128
        %567 = vxpose.xlu0.b32.cont [15/16] 0.0, 128
        %568 = vxpose.xlu0.b32.end [16/16] 0.0, 128
        %v569 = vpop.trf.xlu0
        %v570 = vpop.trf.xlu0
        %v571 = vpop.trf.xlu0
        %v572 = vpop.trf.xlu0
        %v573 = vpop.trf.xlu0
        %v574 = vpop.trf.xlu0
        %v575 = vpop.trf.xlu0
        %v576 = vpop.trf.xlu0
        %v577 = vpop.trf.xlu0
        %v578 = vpop.trf.xlu0
        %v579 = vpop.trf.xlu0
        %v580 = vpop.trf.xlu0
        %v581 = vpop.trf.xlu0
        %v582 = vpop.trf.xlu0
        %v583 = vpop.trf.xlu0
        %v584 = vpop.trf.xlu0
        %585 = vst.msk [vmem:[%s136] sm:$0xff] %vm146, %v569
        %586 = vst.msk [vmem:[%s136 + $0x8] sm:$0xff] %vm146, %v570
        %s587 = smul.u32 2, %s15
        %p588 = scmp.lt.s32.totalorder %s587, 3
        %s589 = scalar_select %p588, %s587, 3
        %s590 = smul.addr %s589, 8
        %s591 = scalar_lea.vmem %s1, %s590
        // Predicated region
        $region29: #{tpu_custom_call.1} parent=23 // pred_check
          %p592 = pneg %p59
        $region30: #{tpu_custom_call.1} parent=23 // pred_check_branch
          %594 = sbr.rel (%p592) target = $region32
        $region31: #{tpu_custom_call.1} parent=23 // pred_region
          %s595 = smul.u32 2, %s15
        $region32: #{tpu_custom_call.1} parent=23 // pred_fallthru
          _
      $region24: #{tpu_custom_call.1} parent=5 // pred_fallthru
        _
      %p596 = scmp.le.s32.totalorder 2, %s10
      // Predicated region
      $region33: #{tpu_custom_call.1} parent=5 // pred_check
        %p597 = pneg %p596
      $region34: #{tpu_custom_call.1} parent=5 // pred_check_branch
        %599 = sbr.rel (%p597) target = $region36
      $region35: #{tpu_custom_call.1} parent=5 // pred_region
        %s600 = ssub.s32 %s10, 2
        // Predicated region
        $region37: #{tpu_custom_call.1} parent=35 // pred_check
          %p601 = pneg %p65
        $region38: #{tpu_custom_call.1} parent=35 // pred_check_branch
          %603 = sbr.rel (%p601) target = $region40
        $region39: #{tpu_custom_call.1} parent=35 // pred_region
          %s604 = smul.u32 2, %s16
          %p605 = scmp.lt.s32.totalorder %s604, 3
          %s606 = scalar_select %p605, %s604, 3
          %s607 = smul.addr %s606, 8
          %s608 = scalar_lea.vmem %s1, %s607
        $region40: #{tpu_custom_call.1} parent=35 // pred_fallthru
          _
      $region36: #{tpu_custom_call.1} parent=5 // pred_fallthru
        _
    $region6: #{tpu_custom_call.1} parent=1 // loop_footer
      %s14 = sadd.s32 1, %s10
    $region7: #{tpu_custom_call.1} parent=1 // loop_footer_branch
      %9 = sbr.rel target = $region3
    $region8: #{tpu_custom_call.1} parent=1 // loop_exit
      _
    %609 = vsyncpa [#allocation3], 1
    %s610 = scalar_lea.sflag [#allocation3], 1
    %611 = vsyncpa %s610, 1

</llo_original>
